<compile_context>
chip_gen: v7x
topology: tpu7x:2x2x1
jax: 0.10.0
libtpu: 0.0.40
codegen_flags: <defaults>
</compile_context>

<pallas_src>
import jax
import jax.numpy as jnp
from jax.experimental import pallas as pl
from jax.experimental.pallas import tpu as pltpu

# Module defaults from myLSTM.__init__
INPUT_SIZE = 20
OUTPUT_SIZE = 20
HIDDEN_SIZE = 3
NUM_LAYERS = 1  # forward uses a single layer / single time step

LANE = 128
DEFAULT_TILE_B = 512  # batch lanes per grid step for large B


def _round_up(n, m):
    return ((n + m - 1) // m) * m


def lstm_linear_kernel(x_ref, w_g_ref, b_g_ref, w_lin_ref, b_lin_ref, out_ref):
    """One LSTM step (h_0 = c_0 = 0) fused with the output Linear, batch on lanes.

    x_ref     : (INPUT_SIZE,  TILE_B)   x^T tile
    w_g_ref   : (3*H, INPUT_SIZE)       rows = [W_i; W_g; W_o]   (forget gate dropped)
    b_g_ref   : (3*H, 1)                fused (b_ih + b_hh) for gates i, g, o
    w_lin_ref : (OUTPUT_SIZE, H)        nn.Linear weight, used as-is (no transpose)
    b_lin_ref : (OUTPUT_SIZE, 1)
    out_ref   : (OUTPUT_SIZE, TILE_B)   pred^T tile
    """
    H = HIDDEN_SIZE
    x = x_ref[...]                                         # (INPUT_SIZE, TILE_B)

    # Single fused gate projection: (3H, in) @ (in, TILE_B) -> (3H, TILE_B).
    # h_0 == 0, so the recurrent matmul contributes 0; b_hh is folded into b_g.
    gates = jnp.dot(w_g_ref[...], x,
                    preferred_element_type=jnp.float32) + b_g_ref[...]

    i = jax.nn.sigmoid(gates[0:H, :])
    g = jnp.tanh(gates[H:2 * H, :])
    o = jax.nn.sigmoid(gates[2 * H:3 * H, :])

    # c_0 == 0  ->  c_1 = i * g   (forget-gate term exactly zero, removed).
    h1 = o * jnp.tanh(i * g)                               # (H, TILE_B)

    out_ref[...] = (jnp.dot(w_lin_ref[...], h1,
                            preferred_element_type=jnp.float32)
                    + b_lin_ref[...]).astype(out_ref.dtype)


def init_params(key):
    """Deterministic synthetic params, same shapes/init scheme as nn.LSTM / nn.Linear,
    pre-packed into the fused layout the kernel consumes."""
    k = 1.0 / jnp.sqrt(jnp.float32(HIDDEN_SIZE))
    keys = jax.random.split(key, 6)
    # PyTorch layouts: weight_ih_l0 (4H, in), weight_hh_l0 (4H, H), biases (4H,)
    w_ih = jax.random.uniform(keys[0], (4 * HIDDEN_SIZE, INPUT_SIZE), jnp.float32, -k, k)
    _w_hh = jax.random.uniform(keys[1], (4 * HIDDEN_SIZE, HIDDEN_SIZE), jnp.float32, -k, k)  # unused: h_0 == 0
    b_ih = jax.random.uniform(keys[2], (4 * HIDDEN_SIZE,), jnp.float32, -k, k)
    b_hh = jax.random.uniform(keys[3], (4 * HIDDEN_SIZE,), jnp.float32, -k, k)
    # nn.Linear(H, out): weight (out, H), bias (out,)
    w_lin = jax.random.uniform(keys[4], (OUTPUT_SIZE, HIDDEN_SIZE), jnp.float32, -k, k)
    b_lin = jax.random.uniform(keys[5], (OUTPUT_SIZE,), jnp.float32, -k, k)

    H = HIDDEN_SIZE
    b_all = b_ih + b_hh
    # PyTorch gate order is (i, f, g, o); the forget gate is dead because c_0 == 0.
    live = (0, 2, 3)  # i, g, o
    w_gates = jnp.concatenate([w_ih[idx * H:(idx + 1) * H, :] for idx in live], axis=0)  # (3H, in)
    b_gates = jnp.concatenate([b_all[idx * H:(idx + 1) * H] for idx in live],
                              axis=0).reshape(3 * H, 1)                                   # (3H, 1)
    return {
        "w_gates": w_gates,                       # (9, 20)
        "b_gates": b_gates,                       # (9, 1)
        "w_lin": w_lin,                           # (20, 3)
        "b_lin": b_lin.reshape(OUTPUT_SIZE, 1),   # (20, 1)
    }


def my_lstm_forward(x, params, tile_b=DEFAULT_TILE_B):
    """x: (B, INPUT_SIZE) float32 -> pred: (B, 1, OUTPUT_SIZE) float32."""
    B = x.shape[0]
    # Batch sits on the lane axis: tile must be a multiple of 128; don't over-pad tiny B.
    tb = min(tile_b, _round_up(B, LANE))
    B_pad = _round_up(B, tb)

    # Present x transposed with the (padded) batch on the last (lane) axis.
    xt = jnp.zeros((INPUT_SIZE, B_pad), jnp.float32).at[:, :B].set(x.T)

    out_t = pl.pallas_call(
        lstm_linear_kernel,
        out_shape=jax.ShapeDtypeStruct((OUTPUT_SIZE, B_pad), jnp.float32),
        grid=(B_pad // tb,),
        in_specs=[
            pl.BlockSpec((INPUT_SIZE, tb), lambda i: (0, i)),             # x^T batch tile
            pl.BlockSpec((3 * HIDDEN_SIZE, INPUT_SIZE), lambda i: (0, 0)),  # resident weights
            pl.BlockSpec((3 * HIDDEN_SIZE, 1), lambda i: (0, 0)),
            pl.BlockSpec((OUTPUT_SIZE, HIDDEN_SIZE), lambda i: (0, 0)),
            pl.BlockSpec((OUTPUT_SIZE, 1), lambda i: (0, 0)),
        ],
        out_specs=pl.BlockSpec((OUTPUT_SIZE, tb), lambda i: (0, i)),
        compiler_params=pltpu.CompilerParams(
            dimension_semantics=("parallel",)),   # 2x on v7x dual TC; harmless v5e/v6e
    )(xt, params["w_gates"], params["b_gates"], params["w_lin"], params["b_lin"])

    # Drop batch padding, transpose back, and match PyTorch pred shape (N, 1, output_size).
    return out_t[:, :B].T.reshape(B, 1, OUTPUT_SIZE)


def reference_forward(x, params):
    """Pure-JAX reference with identical math (sanity check)."""
    H = HIDDEN_SIZE
    gates = x @ params["w_gates"].T + params["b_gates"].T       # (B, 3H)
    i = jax.nn.sigmoid(gates[:, 0:H])
    g = jnp.tanh(gates[:, H:2 * H])
    o = jax.nn.sigmoid(gates[:, 2 * H:3 * H])
    h1 = o * jnp.tanh(i * g)                                    # c_0 = 0
    pred = h1 @ params["w_lin"].T + params["b_lin"].T
    return pred.reshape(x.shape[0], 1, OUTPUT_SIZE)


if __name__ == "__main__":
    key = jax.random.PRNGKey(0)
    pkey, xkey = jax.random.split(key)
    params = init_params(pkey)

    B = 8
    x = jax.random.normal(xkey, (B, INPUT_SIZE), dtype=jnp.float32)

    pred = my_lstm_forward(x, params)
    pred = jax.block_until_ready(pred)

    ref = reference_forward(x, params)
    assert pred.shape == (B, 1, OUTPUT_SIZE), pred.shape
    assert jnp.allclose(pred, ref, atol=1e-5, rtol=1e-5), "mismatch vs reference"

    print("KERNEL_OK")
</pallas_src>

<mosaic_0001>
module attributes {stable_mosaic.version = 11 : i64} {
  func.func @lstm_linear_kernel(%arg0: i32, %arg1: memref<20x128xf32, #tpu.memory_space<vmem>>, %arg2: memref<9x20xf32, #tpu.memory_space<vmem>>, %arg3: memref<9x1xf32, #tpu.memory_space<vmem>>, %arg4: memref<20x3xf32, #tpu.memory_space<vmem>>, %arg5: memref<20x1xf32, #tpu.memory_space<vmem>>, %arg6: memref<20x128xf32, #tpu.memory_space<vmem>>) attributes {dimension_semantics = [#tpu.dimension_semantics<parallel>], iteration_bounds = array<i64: 1>, scalar_prefetch = 0 : i64, scratch_operands = 0 : i64, tpu.core_type = #tpu.core_type<tc>, window_params = [{transform_indices = @transform_0, window_bounds = array<i64: 20, 128>}, {pipeline_mode = #tpu.pipeline_mode<synchronous>, transform_indices = @transform_1, window_bounds = array<i64: 9, 20>}, {pipeline_mode = #tpu.pipeline_mode<synchronous>, transform_indices = @transform_2, window_bounds = array<i64: 9, 1>}, {pipeline_mode = #tpu.pipeline_mode<synchronous>, transform_indices = @transform_3, window_bounds = array<i64: 20, 3>}, {pipeline_mode = #tpu.pipeline_mode<synchronous>, transform_indices = @transform_4, window_bounds = array<i64: 20, 1>}, {transform_indices = @transform_5, window_bounds = array<i64: 20, 128>}]} {
    %c0 = arith.constant 0 : index
    %c0_0 = arith.constant 0 : index
    %0 = vector.load %arg1[%c0, %c0_0] : memref<20x128xf32, #tpu.memory_space<vmem>>, vector<20x128xf32>
    %c0_1 = arith.constant 0 : index
    %c0_2 = arith.constant 0 : index
    %1 = vector.load %arg2[%c0_1, %c0_2] : memref<9x20xf32, #tpu.memory_space<vmem>>, vector<9x20xf32>
    %cst = arith.constant dense<0.000000e+00> : vector<9x128xf32>
    %2 = tpu.matmul %1, %0, %cst {dimension_numbers = #tpu.dot_dimension_numbers<[1], [0], [0], [1], [0, 0, 1, 1], [], []>} : vector<9x20xf32>, vector<20x128xf32>, vector<9x128xf32> -> vector<9x128xf32>
    %c0_3 = arith.constant 0 : index
    %c0_4 = arith.constant 0 : index
    %3 = vector.load %arg3[%c0_3, %c0_4] : memref<9x1xf32, #tpu.memory_space<vmem>>, vector<9x1xf32>
    %4 = vector.broadcast %3 : vector<9x1xf32> to vector<9x128xf32>
    %5 = arith.addf %2, %4 : vector<9x128xf32>
    %6 = vector.extract_strided_slice %5 {offsets = [0, 0], sizes = [3, 128], strides = [1, 1]} : vector<9x128xf32> to vector<3x128xf32>
    %7 = arith.negf %6 : vector<3x128xf32>
    %8 = math.exp %7 : vector<3x128xf32>
    %cst_5 = arith.constant 1.000000e+00 : f32
    %9 = vector.broadcast %cst_5 : f32 to vector<3x128xf32>
    %10 = arith.addf %9, %8 : vector<3x128xf32>
    %11 = arith.divf %9, %10 : vector<3x128xf32>
    %12 = vector.extract_strided_slice %5 {offsets = [3, 0], sizes = [3, 128], strides = [1, 1]} : vector<9x128xf32> to vector<3x128xf32>
    %13 = math.tanh %12 : vector<3x128xf32>
    %14 = vector.extract_strided_slice %5 {offsets = [6, 0], sizes = [3, 128], strides = [1, 1]} : vector<9x128xf32> to vector<3x128xf32>
    %15 = arith.negf %14 : vector<3x128xf32>
    %16 = math.exp %15 : vector<3x128xf32>
    %cst_6 = arith.constant 1.000000e+00 : f32
    %17 = vector.broadcast %cst_6 : f32 to vector<3x128xf32>
    %18 = arith.addf %17, %16 : vector<3x128xf32>
    %19 = arith.divf %17, %18 : vector<3x128xf32>
    %20 = arith.mulf %11, %13 : vector<3x128xf32>
    %21 = math.tanh %20 : vector<3x128xf32>
    %22 = arith.mulf %19, %21 : vector<3x128xf32>
    %c0_7 = arith.constant 0 : index
    %c0_8 = arith.constant 0 : index
    %23 = vector.load %arg4[%c0_7, %c0_8] : memref<20x3xf32, #tpu.memory_space<vmem>>, vector<20x3xf32>
    %cst_9 = arith.constant dense<0.000000e+00> : vector<20x128xf32>
    %24 = tpu.matmul %23, %22, %cst_9 {dimension_numbers = #tpu.dot_dimension_numbers<[1], [0], [0], [1], [0, 0, 1, 1], [], []>} : vector<20x3xf32>, vector<3x128xf32>, vector<20x128xf32> -> vector<20x128xf32>
    %c0_10 = arith.constant 0 : index
    %c0_11 = arith.constant 0 : index
    %25 = vector.load %arg5[%c0_10, %c0_11] : memref<20x1xf32, #tpu.memory_space<vmem>>, vector<20x1xf32>
    %26 = vector.broadcast %25 : vector<20x1xf32> to vector<20x128xf32>
    %27 = arith.addf %24, %26 : vector<20x128xf32>
    %c0_12 = arith.constant 0 : index
    %c0_13 = arith.constant 0 : index
    %28 = vector.load %arg6[%c0_12, %c0_13] : memref<20x128xf32, #tpu.memory_space<vmem>>, vector<20x128xf32>
    tpu.vector_store %arg6[%c0_12, %c0_13], %27 {strides = array<i32>} : memref<20x128xf32, #tpu.memory_space<vmem>>, vector<20x128xf32>,
    return
  }
  func.func @transform_0(%arg0: i32) -> (i32, i32) {
    %c0_i32 = arith.constant 0 : i32
    %c0_i32_0 = arith.constant 0 : i32
    return %c0_i32, %arg0 : i32, i32
  }
  func.func @transform_1(%arg0: i32) -> (i32, i32) {
    %c0_i32 = arith.constant 0 : i32
    %c0_i32_0 = arith.constant 0 : i32
    %c0_i32_1 = arith.constant 0 : i32
    return %c0_i32, %c0_i32_0 : i32, i32
  }
  func.func @transform_2(%arg0: i32) -> (i32, i32) {
    %c0_i32 = arith.constant 0 : i32
    %c0_i32_0 = arith.constant 0 : i32
    %c0_i32_1 = arith.constant 0 : i32
    return %c0_i32, %c0_i32_0 : i32, i32
  }
  func.func @transform_3(%arg0: i32) -> (i32, i32) {
    %c0_i32 = arith.constant 0 : i32
    %c0_i32_0 = arith.constant 0 : i32
    %c0_i32_1 = arith.constant 0 : i32
    return %c0_i32, %c0_i32_0 : i32, i32
  }
  func.func @transform_4(%arg0: i32) -> (i32, i32) {
    %c0_i32 = arith.constant 0 : i32
    %c0_i32_0 = arith.constant 0 : i32
    %c0_i32_1 = arith.constant 0 : i32
    return %c0_i32, %c0_i32_0 : i32, i32
  }
  func.func @transform_5(%arg0: i32) -> (i32, i32) {
    %c0_i32 = arith.constant 0 : i32
    %c0_i32_0 = arith.constant 0 : i32
    return %c0_i32, %arg0 : i32, i32
  }
}

</mosaic_0001>

<llo_original>
// kernel: tpu_custom_call.1
$region0: #{tpu_custom_call.1}
  #allocation0 [shape = 'u32[]', space=smem, size = 0x4, offset = 0x4, fixed_abs, tag = 'smem constant byte address 0x4 - core index']
  #allocation1 [shape = 'u32[144,128]{1,0:T(1,128)}', space=vmem, size = 0x12000, scoped, tag = 'internal scratch']
  %s0 = inlined_call_operand.vmem [shape: f32[20,128], index: 0, kind: input, shape index: {}]
  %s1 = inlined_call_operand.vmem [shape: f32[9,20], index: 1, kind: input, shape index: {}]
  %s2 = inlined_call_operand.vmem [shape: f32[9,1], index: 2, kind: input, shape index: {}]
  %s3 = inlined_call_operand.vmem [shape: f32[20,3], index: 3, kind: input, shape index: {}]
  %s4 = inlined_call_operand.vmem [shape: f32[20,1], index: 4, kind: input, shape index: {}]
  %s5 = inlined_call_operand.hbm [shape: f32[20,128], index: 5, kind: output, shape index: {}]
  %s6 = sld [smem:[#allocation0]]
  $region30: #{tpu_custom_call.1} parent=0
    _
  %s8 = ssub.s32 1, %s6
  %s9 = scalar_select 0, %s8, %s6
  $region1: #{tpu_custom_call.1} parent=0
    #allocation2 [shape = 'u8[12288]{0}', space=vmem, size = 0x3000, scoped, tag = 'output window, operand 0, single buffered']
    #allocation3 [shape = 's32[1]{0}', space=sflag, size = 0x4, scoped, tag = 'scoped memory for tpu_custom_call.1']
    %10 = vsyncpa [#allocation3], 0
    // Predicated region
    $region2: #{tpu_custom_call.1} parent=1 // pred_check
      _
    $region3: #{tpu_custom_call.1} parent=1 // pred_check_branch
      %12 = sbr.rel (0) target = $region5
    $region4: #{tpu_custom_call.1} parent=1 // pred_region
      _
    $region5: #{tpu_custom_call.1} parent=1 // pred_fallthru
      _
    // Predicated region
    $region6: #{tpu_custom_call.1} parent=1 // pred_check
      _
    $region7: #{tpu_custom_call.1} parent=1 // pred_check_branch
      %14 = sbr.rel (0) target = $region9
    $region8: #{tpu_custom_call.1} parent=1 // pred_region
      _
    $region9: #{tpu_custom_call.1} parent=1 // pred_fallthru
      _
    // Predicated region
    $region10: #{tpu_custom_call.1} parent=1 // pred_check
      _
    $region11: #{tpu_custom_call.1} parent=1 // pred_check_branch
      %16 = sbr.rel (0) target = $region13
    $region12: #{tpu_custom_call.1} parent=1 // pred_region
      _
    $region13: #{tpu_custom_call.1} parent=1 // pred_fallthru
      _
    // Predicated region
    $region14: #{tpu_custom_call.1} parent=1 // pred_check
      _
    $region15: #{tpu_custom_call.1} parent=1 // pred_check_branch
      %18 = sbr.rel (0) target = $region17
    $region16: #{tpu_custom_call.1} parent=1 // pred_region
      _
    $region17: #{tpu_custom_call.1} parent=1 // pred_fallthru
      _
    // Predicated region
    $region18: #{tpu_custom_call.1} parent=1 // pred_check
      _
    $region19: #{tpu_custom_call.1} parent=1 // pred_check_branch
      %20 = sbr.rel (0) target = $region21
    $region20: #{tpu_custom_call.1} parent=1 // pred_region
      _
    $region21: #{tpu_custom_call.1} parent=1 // pred_fallthru
      _
    %v21 = vld [vmem:[%s0] sm:$0xff]
    %v22 = vld [vmem:[%s0 + $0x8] sm:$0xff]
    %v23 = vld [vmem:[%s0 + $0x10] sm:$0xf]
    %v24 = vld [vmem:[%s1] sm:$0xff]
    %v25 = vld [vmem:[%s1 + $0x8] sm:$0x1]
    %v26 = vld [vmem:[%s2] sm:$0xff]
    %v27 = vld [vmem:[%s2 + $0x8] sm:$0x1]
    %29 = vset.pattern.permute.xlu0 0
    %30 = vperm.xlu0 %29, %v26
    %v31 = vpop.permute.xlu0 %30
    %34 = vset.pattern.permute.xlu0 0
    %35 = vperm.xlu0 %34, %v27
    %v36 = vpop.permute.xlu0 %35
    %vm38 = vcmask 162816
    %v40 = vsel %vm38, %v24, 0
    %v43 = vsel %vm38, %v25, 0
    %vm45 = vcmask 1043456
    %v47 = vsel %vm45, %v23, 0
    %49 = vmatprep.subr.mxu0 0.0
    %50 = vmatpush1.msra.mxu0 %v21
    %51 = vmatprep.subr.mxu0 0.0
    %52 = vmatpush1.msra.mxu0 %v22
    %53 = vmatprep.subr.mxu0 0.0
    %54 = vmatpush1.msra.mxu0 %v47
    %55 = vmatprep.subr.mxu0 0.0
    %56 = vmatpush1.msra.mxu0 0.0
    %57 = vmatprep.subr.mxu0 0.0
    %58 = vmatpush1.msra.mxu0 0.0
    %59 = vmatprep.subr.mxu0 0.0
    %60 = vmatpush1.msra.mxu0 0.0
    %61 = vmatprep.subr.mxu0 0.0
    %62 = vmatpush1.msra.mxu0 0.0
    %63 = vmatprep.subr.mxu0 0.0
    %64 = vmatpush1.msra.mxu0 0.0
    %65 = vmatprep.subr.mxu0 0.0
    %66 = vmatpush1.msra.mxu0 0.0
    %67 = vmatprep.subr.mxu0 0.0
    %68 = vmatpush1.msra.mxu0 0.0
    %69 = vmatprep.subr.mxu0 0.0
    %70 = vmatpush1.msra.mxu0 0.0
    %71 = vmatprep.subr.mxu0 0.0
    %72 = vmatpush1.msra.mxu0 0.0
    %73 = vmatprep.subr.mxu0 0.0
    %74 = vmatpush1.msra.mxu0 0.0
    %75 = vmatprep.subr.mxu0 0.0
    %76 = vmatpush1.msra.mxu0 0.0
    %77 = vmatprep.subr.mxu0 0.0
    %78 = vmatpush1.msra.mxu0 0.0
    %79 = vmatprep.subr.mxu0 0.0
    %80 = vmatpush1.msra.mxu0 0.0
    %81 = vmatprep.subr.mxu0 0.0
    %82 = vmatpush1.msra.mxu0 0.0
    %83 = vmatprep.subr.mxu0 0.0
    %84 = vmatpush1.msra.mxu0 0.0
    %85 = vmatprep.subr.mxu0 0.0
    %86 = vmatpush1.msra.mxu0 0.0
    %87 = vmatprep.subr.mxu0 0.0
    %88 = vmatpush1.msra.mxu0 0.0
    %89 = vmatprep.subr.mxu0 0.0
    %90 = vmatpush1.msra.mxu0 0.0
    %91 = vmatprep.subr.mxu0 0.0
    %92 = vmatpush1.msra.mxu0 0.0
    %93 = vmatprep.subr.mxu0 0.0
    %94 = vmatpush1.msra.mxu0 0.0
    %95 = vmatprep.subr.mxu0 0.0
    %96 = vmatpush1.msra.mxu0 0.0
    %97 = vmatprep.subr.mxu0 0.0
    %98 = vmatpush1.msra.mxu0 0.0
    %99 = vmatprep.subr.mxu0 0.0
    %100 = vmatpush1.msra.mxu0 0.0
    %101 = vmatprep.subr.mxu0 0.0
    %102 = vmatpush1.msra.mxu0 0.0
    %103 = vmatprep.subr.mxu0 0.0
    %104 = vmatpush1.msra.mxu0 0.0
    %105 = vmatprep.subr.mxu0 0.0
    %106 = vmatpush1.msra.mxu0 0.0
    %107 = vmatprep.subr.mxu0 0.0
    %108 = vmatpush1.msra.mxu0 0.0
    %109 = vmatprep.subr.mxu0 0.0
    %110 = vmatpush1.msra.mxu0 0.0
    %111 = vmatprep.subr.mxu0 0.0
    %112 = vmatpush1.msra.mxu0 0.0
    %113 = vmatprep.mubr.f32.mxu0 0.0
    %114 = vmatmul.mubr.f32.gmra.mrb[0].mxu0 %v40
    %v115 = vpop.f32.mrb[0].mxu0
    %v116 = vadd.f32 %v31, %v115
    %v117 = vpop.f32.mrb[0].mxu0
    %118 = vmatprep.mubr.f32.mxu0 0.0
    %119 = vmatmul.mubr.f32.gmra.mrb[0].mxu0 %v43
    %v120 = vpop.f32.mrb[0].mxu0
    %v121 = vadd.f32 %v36, %v120
    %v122 = vpop.f32.mrb[0].mxu0
    %123 = vdwg.mxu0
    %v124 = vxor.u32 %v116, 2147483648
    %v125 = vmul.f32 %v124, 1.442695
    %v126 = vpow.pop %v125
    %v127 = vadd.f32 %v126, 1.0
    %v128 = vrcp.pop %v127
    %v129 = vmul.f32 1.0, %v128
    %v130 = vtanh.pop %v116
    %v131 = vxor.u32 %v121, 2147483648
    %v132 = vmul.f32 %v131, 1.442695
    %v133 = vpow.pop %v132
    %v134 = vadd.f32 %v133, 1.0
    %v135 = vrcp.pop %v134
    %v136 = vmul.f32 1.0, %v135
    %v138 = vrot.slane %v130, 3
    %v140 = vmul.f32 %v129, %v138
    %v141 = vtanh.pop %v140
    %v143 = vrot.slane %v141, 2
    %v145 = vmul.f32 %v129, %v143
    %v146 = vmul.f32 %v136, %v143
    %v147 = vld [vmem:[%s3] sm:$0xff]
    %v148 = vld [vmem:[%s3 + $0x8] sm:$0xff]
    %v149 = vld [vmem:[%s3 + $0x10] sm:$0xf]
    %v150 = vld [vmem:[%s4] sm:$0xff]
    %v151 = vld [vmem:[%s4 + $0x8] sm:$0xff]
    %v152 = vld [vmem:[%s4 + $0x10] sm:$0xf]
    %154 = vset.pattern.permute.xlu0 0
    %155 = vperm.xlu0 %154, %v150
    %v156 = vpop.permute.xlu0 %155
    %159 = vset.pattern.permute.xlu0 0
    %160 = vperm.xlu0 %159, %v151
    %v161 = vpop.permute.xlu0 %160
    %164 = vset.pattern.permute.xlu0 0
    %165 = vperm.xlu0 %164, %v152
    %v166 = vpop.permute.xlu0 %165
    %vm170 = vcmask 1041408
    %v171 = vrot.slane %v145, 6
    %v172 = vrot.slane %v146, 6
    %v173 = vsel %vm170, %v171, %v172
    %vm174 = vcmask 23552
    %v176 = vsel %vm174, %v147, 0
    %v179 = vsel %vm174, %v148, 0
    %v182 = vsel %vm174, %v149, 0
    %vm184 = vcmask 1042432
    %v185 = vsel %vm184, %v173, 0
    %187 = vmatprep.subr.mxu0 0.0
    %188 = vmatpush1.msra.mxu0 %v185
    %189 = vmatprep.subr.mxu0 0.0
    %190 = vmatpush1.msra.mxu0 0.0
    %191 = vmatprep.subr.mxu0 0.0
    %192 = vmatpush1.msra.mxu0 0.0
    %193 = vmatprep.subr.mxu0 0.0
    %194 = vmatpush1.msra.mxu0 0.0
    %195 = vmatprep.subr.mxu0 0.0
    %196 = vmatpush1.msra.mxu0 0.0
    %197 = vmatprep.subr.mxu0 0.0
    %198 = vmatpush1.msra.mxu0 0.0
    %199 = vmatprep.subr.mxu0 0.0
    %200 = vmatpush1.msra.mxu0 0.0
    %201 = vmatprep.subr.mxu0 0.0
    %202 = vmatpush1.msra.mxu0 0.0
    %203 = vmatprep.subr.mxu0 0.0
    %204 = vmatpush1.msra.mxu0 0.0
    %205 = vmatprep.subr.mxu0 0.0
    %206 = vmatpush1.msra.mxu0 0.0
    %207 = vmatprep.subr.mxu0 0.0
    %208 = vmatpush1.msra.mxu0 0.0
    %209 = vmatprep.subr.mxu0 0.0
    %210 = vmatpush1.msra.mxu0 0.0
    %211 = vmatprep.subr.mxu0 0.0
    %212 = vmatpush1.msra.mxu0 0.0
    %213 = vmatprep.subr.mxu0 0.0
    %214 = vmatpush1.msra.mxu0 0.0
    %215 = vmatprep.subr.mxu0 0.0
    %216 = vmatpush1.msra.mxu0 0.0
    %217 = vmatprep.subr.mxu0 0.0
    %218 = vmatpush1.msra.mxu0 0.0
    %219 = vmatprep.subr.mxu0 0.0
    %220 = vmatpush1.msra.mxu0 0.0
    %221 = vmatprep.subr.mxu0 0.0
    %222 = vmatpush1.msra.mxu0 0.0
    %223 = vmatprep.subr.mxu0 0.0
    %224 = vmatpush1.msra.mxu0 0.0
    %225 = vmatprep.subr.mxu0 0.0
    %226 = vmatpush1.msra.mxu0 0.0
    %227 = vmatprep.subr.mxu0 0.0
    %228 = vmatpush1.msra.mxu0 0.0
    %229 = vmatprep.subr.mxu0 0.0
    %230 = vmatpush1.msra.mxu0 0.0
    %231 = vmatprep.subr.mxu0 0.0
    %232 = vmatpush1.msra.mxu0 0.0
    %233 = vmatprep.subr.mxu0 0.0
    %234 = vmatpush1.msra.mxu0 0.0
    %235 = vmatprep.subr.mxu0 0.0
    %236 = vmatpush1.msra.mxu0 0.0
    %237 = vmatprep.subr.mxu0 0.0
    %238 = vmatpush1.msra.mxu0 0.0
    %239 = vmatprep.subr.mxu0 0.0
    %240 = vmatpush1.msra.mxu0 0.0
    %241 = vmatprep.subr.mxu0 0.0
    %242 = vmatpush1.msra.mxu0 0.0
    %243 = vmatprep.subr.mxu0 0.0
    %244 = vmatpush1.msra.mxu0 0.0
    %245 = vmatprep.subr.mxu0 0.0
    %246 = vmatpush1.msra.mxu0 0.0
    %247 = vmatprep.subr.mxu0 0.0
    %248 = vmatpush1.msra.mxu0 0.0
    %249 = vmatprep.subr.mxu0 0.0
    %250 = vmatpush1.msra.mxu0 0.0
    %251 = vmatprep.mubr.f32.mxu0 0.0
    %252 = vmatmul.mubr.f32.gmra.mrb[0].mxu0 %v176
    %v253 = vpop.f32.mrb[0].mxu0
    %v254 = vadd.f32 %v156, %v253
    %v255 = vpop.f32.mrb[0].mxu0
    %256 = vmatprep.mubr.f32.mxu0 0.0
    %257 = vmatmul.mubr.f32.gmra.mrb[0].mxu0 %v179
    %v258 = vpop.f32.mrb[0].mxu0
    %v259 = vadd.f32 %v161, %v258
    %v260 = vpop.f32.mrb[0].mxu0
    %261 = vmatprep.mubr.f32.mxu0 0.0
    %262 = vmatmul.mubr.f32.gmra.mrb[0].mxu0 %v182
    %v263 = vpop.f32.mrb[0].mxu0
    %v264 = vadd.f32 %v166, %v263
    %v265 = vpop.f32.mrb[0].mxu0
    %266 = vdwg.mxu0
    %267 = vst [vmem:[#allocation2] sm:$0xff] %v254
    %268 = vst [vmem:[#allocation2 + $0x8] sm:$0xff] %v259
    %269 = vst [vmem:[#allocation2 + $0x10] sm:$0xf] %v264
    // Predicated region
    $region22: #{tpu_custom_call.1} parent=1 // pred_check
      _
    $region23: #{tpu_custom_call.1} parent=1 // pred_check_branch
      %271 = sbr.rel (0) target = $region25
    $region24: #{tpu_custom_call.1} parent=1 // pred_region
      %s273 = ssub.s32 384, 384
      %274 = vsyncadd [#allocation3], %s273
      %s275 = sshll.u32 [#allocation2], 4
      %s276 = int_to_ptr.vmem [resolvable:$true] %s275
      %281 = dma.vmem_to_hbm [thread:$0]  %s276, 384, %s5, [#allocation3], 128, 128, 8
    $region25: #{tpu_custom_call.1} parent=1 // pred_fallthru
      _
    // Predicated region
    $region26: #{tpu_custom_call.1} parent=1 // pred_check
      _
    $region27: #{tpu_custom_call.1} parent=1 // pred_check_branch
      %283 = sbr.rel (0) target = $region29
    $region28: #{tpu_custom_call.1} parent=1 // pred_region
      %284 = dma.done [#allocation3], 384
    $region29: #{tpu_custom_call.1} parent=1 // pred_fallthru
      _
    %285 = vsyncpa [#allocation3], 1

</llo_original>
